<compile_context>
chip_gen: v5e
topology: v5e:2x2
jax: 0.10.0
libtpu: 0.0.40
codegen_flags: <defaults>
</compile_context>

<pallas_src>
import numpy as np
import jax
import jax.numpy as jnp
from jax.experimental import pallas as pl
from jax.experimental.pallas import tpu as pltpu


def _round_up(x, m):
    return (x + m - 1) // m * m


def _has_bf16_vpu():
    """v6e / v7x have bf16 VALUs; v5e and older do not."""
    try:
        kind = jax.devices()[0].device_kind.lower()
    except Exception:
        return False
    return ("v6" in kind) or ("v7" in kind)


def _const_spec(shape):
    """Whole-array block whose index never changes; single-buffer it when supported."""
    nd = len(shape)
    imap = lambda b, _nd=nd: (0,) * _nd
    buffered = getattr(pl, "Buffered", None)
    if buffered is not None:
        try:
            return pl.BlockSpec(shape, imap, pipeline_mode=buffered(1))
        except TypeError:
            pass
    return pl.BlockSpec(shape, imap)


def build_sampling_block(dim, T, upsample_scale, downsample_scale,
                         wup_t, bup, wdn_t, bdn, *, groups=1,
                         use_bf16=True, elementwise_bf16=None,
                         channels_first_output=True):
    """Returns (apply_fn, params).  apply_fn(x) with x:(B, T, dim) reproduces
    SamplingBlock.forward (channel-first (B, dim, T_out) output by default)."""
    assert groups == 1, "kernel implemented for groups=1"
    assert upsample_scale > 1 and downsample_scale > 1
    # TODO(synk): the degenerate scale==1 branches of the module are trivial
    # pass-throughs and are not wired into this kernel.

    D = dim
    S_UP, S_DN = upsample_scale, downsample_scale
    K_UP, K_DN = 2 * S_UP, 2 * S_DN
    PAD_UP = S_UP // 2 + S_UP % 2
    PAD_DN = S_DN // 2 + S_DN % 2
    U = T * S_UP
    assert (T - 1) * S_UP - 2 * PAD_UP + K_UP + (S_UP % 2) == U
    assert U % S_DN == 0, "T * upsample_scale must be divisible by downsample_scale"
    N_OUT = U // S_DN
    assert (U + 2 * PAD_DN - K_DN) // S_DN + 1 == N_OUT

    cdt = jnp.bfloat16 if use_bf16 else jnp.float32
    w_item = 2 if use_bf16 else 4
    if elementwise_bf16 is None:
        elementwise_bf16 = use_bf16 and _has_bf16_vpu()
    ew_bf16 = bool(elementwise_bf16) and use_bf16

    # Lane alignment: pad channels to a multiple of 128 so every per-tap lane slice /
    # concat sits on a vreg lane boundary (weights padded here, x padded in-kernel).
    Dp = _round_up(D, 128)
    # TODO(synk): T that is not a multiple of 8 makes the (Bt,T,D)->(Bt*T,D) fold a
    # sublane repack when Bt > 1; pad/tile T if that case ever matters.

    # ---- fuse per-tap weights into single wide matrices (ONCE, at build time) ----
    wup = jnp.asarray(wup_t, jnp.float32)              # (in, out, K_UP)  ConvTranspose1d
    wdn = jnp.asarray(wdn_t, jnp.float32)              # (out, in, K_DN)  Conv1d
    bup_p = jnp.asarray(bup, jnp.float32)
    bdn_p = jnp.asarray(bdn, jnp.float32)
    if Dp != D:
        wup = jnp.pad(wup, ((0, Dp - D), (0, Dp - D), (0, 0)))
        wdn = jnp.pad(wdn, ((0, Dp - D), (0, Dp - D), (0, 0)))
        bup_p = jnp.pad(bup_p, (0, Dp - D))
        bdn_p = jnp.pad(bdn_p, (0, Dp - D))
    # Wup_all columns [k*Dp:(k+1)*Dp] = wup[:, :, k]          (in, out)
    wup_all = jnp.transpose(wup, (0, 2, 1)).reshape(Dp, K_UP * Dp).astype(cdt)
    # Wdn_all rows    [k*Dp:(k+1)*Dp] = wdn[:, :, k].T        (in, out)
    wdn_all = jnp.transpose(wdn, (2, 1, 0)).reshape(K_DN * Dp, Dp).astype(cdt)
    biases = jnp.stack([bup_p, bdn_p])                  # (2, Dp) f32
    wup_all, wdn_all, biases = jax.block_until_ready((wup_all, wdn_all, biases))

    def _plan(B):
        """Pick Bt (batch elements folded per grid step) and an explicit VMEM limit."""
        w_bytes = (Dp * K_UP * Dp + K_DN * Dp * Dp) * w_item + 2 * Dp * 4
        # live f32-equivalent (T, Dp) slabs inside one grid step (taps, rolled tap
        # groups, raw/upmerge/act2 slabs, halos, conv, skips, ...) — conservative.
        inter_units = 5 * S_UP + 3 * S_DN + 6
        per_bt = T * Dp * 4 * (2 + inter_units) + N_OUT * Dp * 4 * 2
        budget = 40 << 20               # headroom inside v7x's 64 MiB per-TC VMEM
        bt = 1
        for cand in range(1, B + 1):
            if B % cand:
                continue
            if B > 1 and cand > B // 2:
                break                   # keep >= 2 grid steps so both v7x TCs get work
            if w_bytes + cand * per_bt > budget:
                break
            bt = cand
            if cand * T >= 1024:        # MXU M saturated; bigger only adds latency
                break
        # TODO(synk): if B is prime and T is small, pad B instead of falling back to Bt=1.
        est = 2 * w_bytes + bt * per_bt
        vmem_limit = int(min(max(32 << 20, est * 5 // 4), 64 << 20))
        return bt, vmem_limit

    def apply(x):
        B = x.shape[0]
        assert x.shape[1:] == (T, D)
        Bt, vmem_limit = _plan(B)
        M1, M2 = Bt * T, Bt * N_OUT
        f32 = jnp.float32

        def kernel(x_ref, wup_ref, wdn_ref, b_ref, o_ref):
            bb = b_ref[...]
            bup_v, bdn_v = bb[0:1], bb[1:2]                        # (1, Dp) each
            x2 = x_ref[...].astype(f32).reshape(M1, D)             # fold batch into rows
            if Dp != D:
                x2 = jnp.concatenate(
                    [x2, jnp.zeros((M1, Dp - D), f32)], axis=-1)   # lane-pad channels

            # ---- stage 1: LeakyReLU(0.2) + ConvTranspose1d, all K_UP taps fused ----
            if ew_bf16:
                xc = x2.astype(cdt)
                act = jnp.where(xc > 0, xc, jnp.asarray(0.2, cdt) * xc)
            else:
                act = jnp.where(x2 > 0, x2, 0.2 * x2).astype(cdt)
            taps = jnp.dot(act, wup_ref[...],
                           preferred_element_type=f32)             # (M1, K_UP*Dp)

            rix1 = jax.lax.broadcasted_iota(jnp.int32, (M1, 1), 0)
            first1 = (rix1 % T) == 0
            last1 = (rix1 % T) == (T - 1)

            # Output position q*S_UP+p takes tap k0 = p+PAD_UP from time q plus one
            # neighbour tap: phases [0, S_UP-PAD_UP) take tap p+PAD_UP+S_UP from q-1,
            # phases [S_UP-PAD_UP, S_UP) take tap p+PAD_UP-S_UP from q+1.  Each group
            # is a lane-contiguous tap range of `taps`, so 2 sublane rolls cover all
            # phases (was S_UP rolls + S_UP wide selects).
            t0_slab = taps[:, PAD_UP * Dp:(PAD_UP + S_UP) * Dp]    # (M1, S_UP*Dp)
            minus = taps[:, (PAD_UP + S_UP) * Dp:]                 # phases needing q-1
            plus = taps[:, :PAD_UP * Dp]                           # phases needing q+1
            zf = jnp.asarray(0.0, f32)
            minus = jnp.where(first1, zf, pltpu.roll(minus, 1, axis=0))
            plus = jnp.where(last1, zf, pltpu.roll(plus, M1 - 1, axis=0))
            raw_w = t0_slab + jnp.concatenate([minus, plus], axis=-1)   # deconv - bias

            xb = x2 + bup_v                                         # hoisted bias add
            upmerge_w = jnp.concatenate([xb] * S_UP, axis=-1) + raw_w   # (M1, S_UP*Dp)

            # ---- refold to downsampler frames (a no-op when S_UP == S_DN) ----
            if S_UP == S_DN:
                um_w, first2, last2 = upmerge_w, first1, last1
            else:
                # TODO(synk): this reshape is a real sublane<->lane relayout; if
                # S_UP != S_DN ever matters, restructure per output frame instead.
                um_w = upmerge_w.reshape(M2, S_DN * Dp)
                rix2 = jax.lax.broadcasted_iota(jnp.int32, (M2, 1), 0)
                first2 = (rix2 % N_OUT) == 0
                last2 = (rix2 % N_OUT) == (N_OUT - 1)

            # ---- stage 2: LeakyReLU(0.2) + strided Conv1d as 3 accumulating dots ----
            if ew_bf16:
                umc = um_w.astype(cdt)
                act2 = jnp.where(umc > 0, umc, jnp.asarray(0.2, cdt) * umc)
            else:
                act2 = jnp.where(um_w > 0, um_w, 0.2 * um_w).astype(cdt)
            zc = jnp.asarray(0.0, act2.dtype)
            prev_h = jnp.where(first2, zc,
                               pltpu.roll(act2[:, (S_DN - PAD_DN) * Dp:], 1, axis=0))
            next_h = jnp.where(last2, zc,
                               pltpu.roll(act2[:, :(S_DN - PAD_DN) * Dp], M2 - 1, axis=0))
            conv = jnp.dot(act2, wdn_ref[PAD_DN * Dp:(PAD_DN + S_DN) * Dp, :],
                           preferred_element_type=f32)
            conv = conv + jnp.dot(prev_h, wdn_ref[:PAD_DN * Dp, :],
                                  preferred_element_type=f32)
            conv = conv + jnp.dot(next_h, wdn_ref[(PAD_DN + S_DN) * Dp:, :],
                                  preferred_element_type=f32)
            conv = conv + bdn_v

            # ---- skip_downsampler(rep) + skip_downsampler(upmerge) ----
            if S_UP == S_DN:
                # frame n covers exactly the S_UP phases of time n:
                # mean(2*x + deconv) = 2*x + bup + mean_p(raw_p)  — no skipin_w slab.
                raw_sum = raw_w[:, :Dp]
                for j in range(1, S_UP):
                    raw_sum = raw_sum + raw_w[:, j * Dp:(j + 1) * Dp]
                skips = 2.0 * x2 + bup_v + raw_sum * (1.0 / S_DN)
            else:
                skipin_w = (jnp.concatenate([x2] * S_UP, axis=-1)
                            + upmerge_w).reshape(M2, S_DN * Dp)
                ssum = skipin_w[:, :Dp]
                for j in range(1, S_DN):
                    ssum = ssum + skipin_w[:, j * Dp:(j + 1) * Dp]
                skips = ssum * (1.0 / S_DN)

            out = conv + skips
            if Dp != D:
                out = out[:, :D]
            o_ref[...] = out.reshape(Bt, N_OUT, D).astype(o_ref.dtype)

        flops = 2 * B * (T * Dp * K_UP * Dp + N_OUT * K_DN * Dp * Dp)
        bytes_accessed = (4 * (B * T * D + B * N_OUT * D + 2 * Dp)
                          + w_item * (Dp * K_UP * Dp + K_DN * Dp * Dp))

        out = pl.pallas_call(
            kernel,
            out_shape=jax.ShapeDtypeStruct((B, N_OUT, D), jnp.float32),
            grid=(B // Bt,),
            in_specs=[
                pl.BlockSpec((Bt, T, D), lambda b: (b, 0, 0)),
                _const_spec(wup_all.shape),
                _const_spec(wdn_all.shape),
                _const_spec(biases.shape),
            ],
            out_specs=pl.BlockSpec((Bt, N_OUT, D), lambda b: (b, 0, 0)),
            compiler_params=pltpu.CompilerParams(
                dimension_semantics=("parallel",),
                vmem_limit_bytes=vmem_limit),
            cost_estimate=pl.CostEstimate(
                flops=flops, transcendentals=0, bytes_accessed=bytes_accessed),
        )(x, wup_all, wdn_all, biases)

        if channels_first_output:
            # PyTorch returns channel-first (B, dim, N_OUT).
            # TODO(synk): pass channels_first_output=False downstream to keep the
            # lane-dense (B, N_OUT, dim) kernel output and skip this HBM round trip.
            out = jnp.transpose(out, (0, 2, 1))
        return out

    params = dict(S_UP=S_UP, S_DN=S_DN, K_UP=K_UP, K_DN=K_DN,
                  PAD_UP=PAD_UP, PAD_DN=PAD_DN, U=U, N_OUT=N_OUT)
    return apply, params


def reference(x, wup_t, bup, wdn_t, bdn, p):
    """Pure numpy reference following the PyTorch definitions directly."""
    x = np.asarray(x, np.float32)
    wup_t, bup = np.asarray(wup_t), np.asarray(bup)
    wdn_t, bdn = np.asarray(wdn_t), np.asarray(bdn)
    B, T, D = x.shape
    S_UP, S_DN, U, N_OUT = p["S_UP"], p["S_DN"], p["U"], p["N_OUT"]

    xt = np.transpose(x, (0, 2, 1))                     # (B, D, T)
    rep = np.repeat(xt, S_UP, axis=2)                   # repeat_upsampler
    a = np.where(xt > 0, xt, 0.2 * xt)                  # LeakyReLU(0.2)
    deconv = np.zeros((B, D, U), np.float32)            # ConvTranspose1d
    for k in range(p["K_UP"]):
        for ti in range(T):
            to = ti * S_UP - p["PAD_UP"] + k
            if 0 <= to < U:
                deconv[:, :, to] += a[:, :, ti] @ wup_t[:, :, k]
    deconv += bup[None, :, None]
    upmerge = rep + deconv
    b2 = np.where(upmerge > 0, upmerge, 0.2 * upmerge)  # LeakyReLU(0.2)
    conv = np.zeros((B, D, N_OUT), np.float32)          # strided Conv1d
    for k in range(p["K_DN"]):
        for to in range(N_OUT):
            ti = to * S_DN - p["PAD_DN"] + k
            if 0 <= ti < U:
                conv[:, :, to] += b2[:, :, ti] @ wdn_t[:, :, k].T
    conv += bdn[None, :, None]
    skip2 = upmerge.reshape(B, D, N_OUT, S_DN).mean(-1)  # skip_downsampler
    skip1 = rep.reshape(B, D, N_OUT, S_DN).mean(-1)
    return conv + skip1 + skip2


if __name__ == "__main__":
    B, T, dim = 4, 8, 32          # B=4 -> Bt=2, grid=2: exercises batch-fold + megacore
    up, dn = 2, 2

    key = jax.random.PRNGKey(0)
    kx, k1, k2, k3, k4 = jax.random.split(key, 5)
    x = jax.random.normal(kx, (B, T, dim), jnp.float32)
    # deterministic synthetic parameters (shapes follow nn.ConvTranspose1d / nn.Conv1d)
    wup_t = 0.1 * jax.random.normal(k1, (dim, dim, 2 * up), jnp.float32)  # (in, out, K)
    bup = 0.1 * jax.random.normal(k2, (dim,), jnp.float32)
    wdn_t = 0.1 * jax.random.normal(k3, (dim, dim, 2 * dn), jnp.float32)  # (out, in, K)
    bdn = 0.1 * jax.random.normal(k4, (dim,), jnp.float32)

    # exact path (f32 MXU, f32 elementwise): tight check of the restructured dataflow
    fn32, params = build_sampling_block(dim, T, up, dn, wup_t, bup, wdn_t, bdn,
                                        use_bf16=False)
    out32 = jax.block_until_ready(fn32(x))
    # production path (bf16 MXU inputs, bf16 elementwise on v6e/v7x, f32 accumulation)
    fn16, _ = build_sampling_block(dim, T, up, dn, wup_t, bup, wdn_t, bdn,
                                   use_bf16=True)
    out16 = jax.block_until_ready(fn16(x))

    ref = reference(x, wup_t, bup, wdn_t, bdn, params)
    assert out32.shape == out16.shape == ref.shape == (B, dim, params["N_OUT"])
    np.testing.assert_allclose(np.asarray(out32), ref, atol=1e-3, rtol=1e-3)
    np.testing.assert_allclose(np.asarray(out16), ref, atol=8e-2, rtol=8e-2)
    print("KERNEL_OK")
</pallas_src>

<mosaic_0001>
module attributes {stable_mosaic.version = 11 : i64} {
  func.func @kernel(%arg0: i32, %arg1: memref<2x8x32xf32, #tpu.memory_space<vmem>>, %arg2: memref<128x512xf32, #tpu.memory_space<vmem>>, %arg3: memref<512x128xf32, #tpu.memory_space<vmem>>, %arg4: memref<2x128xf32, #tpu.memory_space<vmem>>, %arg5: memref<2x8x32xf32, #tpu.memory_space<vmem>>) attributes {dimension_semantics = [#tpu.dimension_semantics<parallel>], iteration_bounds = array<i64: 2>, scalar_prefetch = 0 : i64, scratch_operands = 0 : i64, tpu.core_type = #tpu.core_type<tc>, window_params = [{transform_indices = @transform_0, window_bounds = array<i64: 2, 8, 32>}, {pipeline_mode = #tpu.pipeline_mode<synchronous>, transform_indices = @transform_1, window_bounds = array<i64: 128, 512>}, {pipeline_mode = #tpu.pipeline_mode<synchronous>, transform_indices = @transform_2, window_bounds = array<i64: 512, 128>}, {pipeline_mode = #tpu.pipeline_mode<synchronous>, transform_indices = @transform_3, window_bounds = array<i64: 2, 128>}, {transform_indices = @transform_4, window_bounds = array<i64: 2, 8, 32>}]} {
    %c0 = arith.constant 0 : index
    %c0_0 = arith.constant 0 : index
    %0 = vector.load %arg4[%c0, %c0_0] : memref<2x128xf32, #tpu.memory_space<vmem>>, vector<2x128xf32>
    %1 = vector.extract_strided_slice %0 {offsets = [0, 0], sizes = [1, 128], strides = [1, 1]} : vector<2x128xf32> to vector<1x128xf32>
    %2 = vector.extract_strided_slice %0 {offsets = [1, 0], sizes = [1, 128], strides = [1, 1]} : vector<2x128xf32> to vector<1x128xf32>
    %c0_1 = arith.constant 0 : index
    %c0_2 = arith.constant 0 : index
    %c0_3 = arith.constant 0 : index
    %3 = vector.load %arg1[%c0_1, %c0_2, %c0_3] : memref<2x8x32xf32, #tpu.memory_space<vmem>>, vector<2x8x32xf32>
    %4 = vector.shape_cast %3 : vector<2x8x32xf32> to vector<16x32xf32>
    %cst = arith.constant 0.000000e+00 : f32
    %5 = vector.broadcast %cst : f32 to vector<16x96xf32>
    %6 = tpu.concatenate %4, %5 in 1 : vector<16x32xf32>, vector<16x96xf32> -> vector<16x128xf32>
    %cst_4 = arith.constant 0.000000e+00 : f32
    %7 = vector.broadcast %cst_4 : f32 to vector<16x128xf32>
    %8 = arith.cmpf ogt, %6, %7 : vector<16x128xf32>
    %cst_5 = arith.constant 2.000000e-01 : f32
    %9 = vector.broadcast %cst_5 : f32 to vector<16x128xf32>
    %10 = arith.mulf %9, %6 : vector<16x128xf32>
    %11 = arith.select %8, %6, %10 : vector<16x128xi1>, vector<16x128xf32>
    %c0_6 = arith.constant 0 : index
    %c0_7 = arith.constant 0 : index
    %12 = vector.load %arg2[%c0_6, %c0_7] : memref<128x512xf32, #tpu.memory_space<vmem>>, vector<128x512xf32>
    %cst_8 = arith.constant dense<0.000000e+00> : vector<16x512xf32>
    %13 = tpu.matmul %11, %12, %cst_8 {dimension_numbers = #tpu.dot_dimension_numbers<[1], [0], [0], [1], [0, 0, 1, 1], [], []>} : vector<16x128xf32>, vector<128x512xf32>, vector<16x512xf32> -> vector<16x512xf32>
    %14 = tpu.iota {dimensions = array<i32: 0>} : vector<16x1xi32>
    %c8_i32 = arith.constant 8 : i32
    %c0_i32 = arith.constant 0 : i32
    %15 = arith.cmpi eq, %c8_i32, %c0_i32 : i32
    %c1_i32 = arith.constant 1 : i32
    %16 = arith.select %15, %c1_i32, %c8_i32 : i32
    %17 = vector.broadcast %16 : i32 to vector<16x1xi32>
    %18 = arith.remsi %14, %17 : vector<16x1xi32>
    %c0_i32_9 = arith.constant 0 : i32
    %19 = vector.broadcast %c0_i32_9 : i32 to vector<16x1xi32>
    %20 = arith.cmpi ne, %18, %19 : vector<16x1xi32>
    %c0_i32_10 = arith.constant 0 : i32
    %21 = vector.broadcast %c0_i32_10 : i32 to vector<16x1xi32>
    %22 = arith.cmpi slt, %18, %21 : vector<16x1xi32>
    %c0_i32_11 = arith.constant 0 : i32
    %23 = arith.cmpi slt, %16, %c0_i32_11 : i32
    %24 = vector.broadcast %23 : i1 to vector<16x1xi1>
    %25 = vector.broadcast %24 : vector<16x1xi1> to vector<16x1xi1>
    %26 = arith.xori %22, %25 : vector<16x1xi1>
    %27 = arith.andi %26, %20 : vector<16x1xi1>
    %28 = vector.broadcast %16 : i32 to vector<16x1xi32>
    %29 = arith.addi %18, %28 : vector<16x1xi32>
    %30 = arith.select %27, %29, %18 : vector<16x1xi1>, vector<16x1xi32>
    %c0_i32_12 = arith.constant 0 : i32
    %31 = vector.broadcast %c0_i32_12 : i32 to vector<16x1xi32>
    %32 = arith.cmpi eq, %30, %31 : vector<16x1xi32>
    %c8_i32_13 = arith.constant 8 : i32
    %c0_i32_14 = arith.constant 0 : i32
    %33 = arith.cmpi eq, %c8_i32_13, %c0_i32_14 : i32
    %c1_i32_15 = arith.constant 1 : i32
    %34 = arith.select %33, %c1_i32_15, %c8_i32_13 : i32
    %35 = vector.broadcast %34 : i32 to vector<16x1xi32>
    %36 = arith.remsi %14, %35 : vector<16x1xi32>
    %c0_i32_16 = arith.constant 0 : i32
    %37 = vector.broadcast %c0_i32_16 : i32 to vector<16x1xi32>
    %38 = arith.cmpi ne, %36, %37 : vector<16x1xi32>
    %c0_i32_17 = arith.constant 0 : i32
    %39 = vector.broadcast %c0_i32_17 : i32 to vector<16x1xi32>
    %40 = arith.cmpi slt, %36, %39 : vector<16x1xi32>
    %c0_i32_18 = arith.constant 0 : i32
    %41 = arith.cmpi slt, %34, %c0_i32_18 : i32
    %42 = vector.broadcast %41 : i1 to vector<16x1xi1>
    %43 = vector.broadcast %42 : vector<16x1xi1> to vector<16x1xi1>
    %44 = arith.xori %40, %43 : vector<16x1xi1>
    %45 = arith.andi %44, %38 : vector<16x1xi1>
    %46 = vector.broadcast %34 : i32 to vector<16x1xi32>
    %47 = arith.addi %36, %46 : vector<16x1xi32>
    %48 = arith.select %45, %47, %36 : vector<16x1xi1>, vector<16x1xi32>
    %c7_i32 = arith.constant 7 : i32
    %49 = vector.broadcast %c7_i32 : i32 to vector<16x1xi32>
    %50 = arith.cmpi eq, %48, %49 : vector<16x1xi32>
    %51 = vector.extract_strided_slice %13 {offsets = [0, 128], sizes = [16, 256], strides = [1, 1]} : vector<16x512xf32> to vector<16x256xf32>
    %52 = vector.extract_strided_slice %13 {offsets = [0, 384], sizes = [16, 128], strides = [1, 1]} : vector<16x512xf32> to vector<16x128xf32>
    %53 = vector.extract_strided_slice %13 {offsets = [0, 0], sizes = [16, 128], strides = [1, 1]} : vector<16x512xf32> to vector<16x128xf32>
    %c1_i32_19 = arith.constant 1 : i32
    %54 = tpu.dynamic_rotate %52 by %c1_i32_19 dim 0 : vector<16x128xf32>, i32 -> vector<16x128xf32>
    %cst_20 = arith.constant 0.000000e+00 : f32
    %55 = vector.shape_cast %32 : vector<16x1xi1> to vector<16x1xi1>
    %56 = vector.broadcast %55 : vector<16x1xi1> to vector<16x128xi1>
    %57 = vector.broadcast %cst_20 : f32 to vector<16x128xf32>
    %58 = arith.select %56, %57, %54 : vector<16x128xi1>, vector<16x128xf32>
    %c15_i32 = arith.constant 15 : i32
    %59 = tpu.dynamic_rotate %53 by %c15_i32 dim 0 : vector<16x128xf32>, i32 -> vector<16x128xf32>
    %cst_21 = arith.constant 0.000000e+00 : f32
    %60 = vector.shape_cast %50 : vector<16x1xi1> to vector<16x1xi1>
    %61 = vector.broadcast %60 : vector<16x1xi1> to vector<16x128xi1>
    %62 = vector.broadcast %cst_21 : f32 to vector<16x128xf32>
    %63 = arith.select %61, %62, %59 : vector<16x128xi1>, vector<16x128xf32>
    %64 = tpu.concatenate %58, %63 in 1 : vector<16x128xf32>, vector<16x128xf32> -> vector<16x256xf32>
    %65 = arith.addf %51, %64 : vector<16x256xf32>
    %66 = vector.broadcast %1 : vector<1x128xf32> to vector<16x128xf32>
    %67 = arith.addf %6, %66 : vector<16x128xf32>
    %68 = tpu.concatenate %67, %67 in 1 : vector<16x128xf32>, vector<16x128xf32> -> vector<16x256xf32>
    %69 = arith.addf %68, %65 : vector<16x256xf32>
    %cst_22 = arith.constant 0.000000e+00 : f32
    %70 = vector.broadcast %cst_22 : f32 to vector<16x256xf32>
    %71 = arith.cmpf ogt, %69, %70 : vector<16x256xf32>
    %cst_23 = arith.constant 2.000000e-01 : f32
    %72 = vector.broadcast %cst_23 : f32 to vector<16x256xf32>
    %73 = arith.mulf %72, %69 : vector<16x256xf32>
    %74 = arith.select %71, %69, %73 : vector<16x256xi1>, vector<16x256xf32>
    %75 = vector.extract_strided_slice %74 {offsets = [0, 128], sizes = [16, 128], strides = [1, 1]} : vector<16x256xf32> to vector<16x128xf32>
    %c1_i32_24 = arith.constant 1 : i32
    %76 = tpu.dynamic_rotate %75 by %c1_i32_24 dim 0 : vector<16x128xf32>, i32 -> vector<16x128xf32>
    %cst_25 = arith.constant 0.000000e+00 : f32
    %77 = vector.shape_cast %32 : vector<16x1xi1> to vector<16x1xi1>
    %78 = vector.broadcast %77 : vector<16x1xi1> to vector<16x128xi1>
    %79 = vector.broadcast %cst_25 : f32 to vector<16x128xf32>
    %80 = arith.select %78, %79, %76 : vector<16x128xi1>, vector<16x128xf32>
    %81 = vector.extract_strided_slice %74 {offsets = [0, 0], sizes = [16, 128], strides = [1, 1]} : vector<16x256xf32> to vector<16x128xf32>
    %c15_i32_26 = arith.constant 15 : i32
    %82 = tpu.dynamic_rotate %81 by %c15_i32_26 dim 0 : vector<16x128xf32>, i32 -> vector<16x128xf32>
    %cst_27 = arith.constant 0.000000e+00 : f32
    %83 = vector.shape_cast %50 : vector<16x1xi1> to vector<16x1xi1>
    %84 = vector.broadcast %83 : vector<16x1xi1> to vector<16x128xi1>
    %85 = vector.broadcast %cst_27 : f32 to vector<16x128xf32>
    %86 = arith.select %84, %85, %82 : vector<16x128xi1>, vector<16x128xf32>
    %c128 = arith.constant 128 : index
    %c0_28 = arith.constant 0 : index
    %87 = vector.load %arg3[%c128, %c0_28] : memref<512x128xf32, #tpu.memory_space<vmem>>, vector<256x128xf32>
    %cst_29 = arith.constant dense<0.000000e+00> : vector<16x128xf32>
    %88 = tpu.matmul %74, %87, %cst_29 {dimension_numbers = #tpu.dot_dimension_numbers<[1], [0], [0], [1], [0, 0, 1, 1], [], []>} : vector<16x256xf32>, vector<256x128xf32>, vector<16x128xf32> -> vector<16x128xf32>
    %c0_30 = arith.constant 0 : index
    %c0_31 = arith.constant 0 : index
    %89 = vector.load %arg3[%c0_30, %c0_31] : memref<512x128xf32, #tpu.memory_space<vmem>>, vector<128x128xf32>
    %cst_32 = arith.constant dense<0.000000e+00> : vector<16x128xf32>
    %90 = tpu.matmul %80, %89, %cst_32 {dimension_numbers = #tpu.dot_dimension_numbers<[1], [0], [0], [1], [0, 0, 1, 1], [], []>} : vector<16x128xf32>, vector<128x128xf32>, vector<16x128xf32> -> vector<16x128xf32>
    %91 = arith.addf %88, %90 : vector<16x128xf32>
    %c384 = arith.constant 384 : index
    %c0_33 = arith.constant 0 : index
    %92 = vector.load %arg3[%c384, %c0_33] : memref<512x128xf32, #tpu.memory_space<vmem>>, vector<128x128xf32>
    %cst_34 = arith.constant dense<0.000000e+00> : vector<16x128xf32>
    %93 = tpu.matmul %86, %92, %cst_34 {dimension_numbers = #tpu.dot_dimension_numbers<[1], [0], [0], [1], [0, 0, 1, 1], [], []>} : vector<16x128xf32>, vector<128x128xf32>, vector<16x128xf32> -> vector<16x128xf32>
    %94 = arith.addf %91, %93 : vector<16x128xf32>
    %95 = vector.broadcast %2 : vector<1x128xf32> to vector<16x128xf32>
    %96 = arith.addf %94, %95 : vector<16x128xf32>
    %97 = vector.extract_strided_slice %65 {offsets = [0, 0], sizes = [16, 128], strides = [1, 1]} : vector<16x256xf32> to vector<16x128xf32>
    %98 = vector.extract_strided_slice %65 {offsets = [0, 128], sizes = [16, 128], strides = [1, 1]} : vector<16x256xf32> to vector<16x128xf32>
    %99 = arith.addf %97, %98 : vector<16x128xf32>
    %cst_35 = arith.constant 2.000000e+00 : f32
    %100 = vector.broadcast %cst_35 : f32 to vector<16x128xf32>
    %101 = arith.mulf %100, %6 : vector<16x128xf32>
    %102 = vector.broadcast %1 : vector<1x128xf32> to vector<16x128xf32>
    %103 = arith.addf %101, %102 : vector<16x128xf32>
    %cst_36 = arith.constant 5.000000e-01 : f32
    %104 = vector.broadcast %cst_36 : f32 to vector<16x128xf32>
    %105 = arith.mulf %99, %104 : vector<16x128xf32>
    %106 = arith.addf %103, %105 : vector<16x128xf32>
    %107 = arith.addf %96, %106 : vector<16x128xf32>
    %108 = vector.extract_strided_slice %107 {offsets = [0, 0], sizes = [16, 32], strides = [1, 1]} : vector<16x128xf32> to vector<16x32xf32>
    %109 = vector.shape_cast %108 : vector<16x32xf32> to vector<2x8x32xf32>
    %c0_37 = arith.constant 0 : index
    %c0_38 = arith.constant 0 : index
    %c0_39 = arith.constant 0 : index
    %110 = vector.load %arg5[%c0_37, %c0_38, %c0_39] : memref<2x8x32xf32, #tpu.memory_space<vmem>>, vector<2x8x32xf32>
    tpu.vector_store %arg5[%c0_37, %c0_38, %c0_39], %109 {strides = array<i32>} : memref<2x8x32xf32, #tpu.memory_space<vmem>>, vector<2x8x32xf32>,
    return
  }
  func.func @transform_0(%arg0: i32) -> (i32, i32, i32) {
    %c0_i32 = arith.constant 0 : i32
    %c0_i32_0 = arith.constant 0 : i32
    %c0_i32_1 = arith.constant 0 : i32
    return %arg0, %c0_i32, %c0_i32_0 : i32, i32, i32
  }
  func.func @transform_1(%arg0: i32) -> (i32, i32) {
    %c0_i32 = arith.constant 0 : i32
    %c0_i32_0 = arith.constant 0 : i32
    %c0_i32_1 = arith.constant 0 : i32
    return %c0_i32, %c0_i32_0 : i32, i32
  }
  func.func @transform_2(%arg0: i32) -> (i32, i32) {
    %c0_i32 = arith.constant 0 : i32
    %c0_i32_0 = arith.constant 0 : i32
    %c0_i32_1 = arith.constant 0 : i32
    return %c0_i32, %c0_i32_0 : i32, i32
  }
  func.func @transform_3(%arg0: i32) -> (i32, i32) {
    %c0_i32 = arith.constant 0 : i32
    %c0_i32_0 = arith.constant 0 : i32
    %c0_i32_1 = arith.constant 0 : i32
    return %c0_i32, %c0_i32_0 : i32, i32
  }
  func.func @transform_4(%arg0: i32) -> (i32, i32, i32) {
    %c0_i32 = arith.constant 0 : i32
    %c0_i32_0 = arith.constant 0 : i32
    %c0_i32_1 = arith.constant 0 : i32
    return %arg0, %c0_i32, %c0_i32_0 : i32, i32, i32
  }
}

</mosaic_0001>

<llo_original>
// kernel: tpu_custom_call.1
$region0: #{tpu_custom_call.1}
  #allocation0 [shape = 'u32[]', space=smem, size = 0x4, offset = 0x4, fixed_abs, tag = 'smem constant byte address 0x4 - core index']
  #allocation1 [shape = 'u32[72,128]{1,0:T(1,128)}', space=vmem, size = 0x9000, scoped, tag = 'internal scratch']
  %s0 = inlined_call_operand.hbm [shape: f32[4,8,32], index: 0, kind: input, shape index: {}]
  %s1 = inlined_call_operand.hbm [shape: f32[128,512], index: 1, kind: input, shape index: {}]
  %s2 = inlined_call_operand.hbm [shape: f32[512,128], index: 2, kind: input, shape index: {}]
  %s3 = inlined_call_operand.vmem [shape: f32[2,128], index: 3, kind: input, shape index: {}]
  %s4 = inlined_call_operand.hbm [shape: f32[4,8,32], index: 4, kind: output, shape index: {}]
  %s5 = sld [smem:[#allocation0]]
  $region61: #{tpu_custom_call.1} parent=0
    _
  %s7 = ssub.s32 1, %s5
  %s8 = scalar_select 0, %s7, %s5
  $region1: #{tpu_custom_call.1} parent=0
    #allocation2 [shape = 'u8[16384]{0}', space=vmem, size = 0x4000, scoped, tag = 'input window, operand 0']
    #allocation3 [shape = 's32[2]{0}', space=sflag, size = 0x8, scoped, tag = 'scoped memory for tpu_custom_call.1']
    #allocation4 [shape = 's32[2]{0}', space=sflag, size = 0x8, scoped, tag = 'scoped memory for tpu_custom_call.1']
    #allocation5 [shape = 'u8[262144]{0}', space=vmem, size = 0x40000, scoped, tag = 'input window, operand 1, single buffered']
    #allocation6 [shape = 's32[1]{0}', space=sflag, size = 0x4, scoped, tag = 'scoped memory for tpu_custom_call.1']
    #allocation7 [shape = 'u8[262144]{0}', space=vmem, size = 0x40000, scoped, tag = 'input window, operand 2, single buffered']
    #allocation8 [shape = 'u8[16384]{0}', space=vmem, size = 0x4000, scoped, tag = 'output window, operand 0']
    %9 = vsyncpa [#allocation3], 0
    %s10 = scalar_lea.sflag [#allocation3], 1
    %11 = vsyncpa %s10, 0
    %12 = vsyncpa [#allocation6], 0
    %13 = vsyncpa [#allocation4], 0
    %s14 = scalar_lea.sflag [#allocation4], 1
    %15 = vsyncpa %s14, 0
    loop: start=0, step=1, limit=4
    $region2: #{tpu_custom_call.1} parent=1 // loop_pre_header
      _
    $region3: #{tpu_custom_call.1} parent=1 // loop_header
      %s17 = sphi 0, %s21
      %p18 = scmp.ge.s32.totalorder %s17, 4
      %s27 = sphi 0, %s29
      %s30 = sphi 0, %s27
      %s31 = sphi 0, %s30
      %s47 = sphi 0, %s31
      %s51 = sphi 0, %s51
      %s53 = sphi 0, %s51
      %s54 = sphi 0, %s53
      %s68 = sphi 0, %s54
      %s72 = sphi 0, %s72
      %s74 = sphi 0, %s72
      %s75 = sphi 0, %s74
      %s89 = sphi 0, %s75
      %s93 = sphi 0, %s93
      %s95 = sphi 0, %s93
      %s96 = sphi 0, %s95
      %s110 = sphi 0, %s96
      %s116 = sphi 0, %s118
      %s119 = sphi 0, %s116
      %s120 = sphi 0, %s119
      %s136 = sphi 0, %s120
    $region4: #{tpu_custom_call.1} parent=1 // loop_header_branch
      %20 = sbr.rel (%p18) target = $region8
    $region5: #{tpu_custom_call.1} parent=1 // loop_body
      %s22 = ssub.s32 %s17, 1
      %s23 = ssub.s32 %s17, 2
      %s24 = sadd.s32 %s17, 1
      %s25 = ssub.s32 %s17, %s24
      %p26 = scmp.eq.s32.totalorder %s25, 0
      %s28 = sadd.s32 %s27, 1
      %s29 = scalar_select %p26, %s27, %s28
      %p32 = pneg %p26
      %p33 = scmp.eq.s32.totalorder %s17, 1
      %p34 = por %p32, %p33
      %p35 = scmp.ne.s32.totalorder %s27, %s30
      %p36 = scmp.eq.s32.totalorder %s17, 0
      %p37 = por %p35, %p36
      %p38 = scmp.ne.s32.totalorder %s27, %s30
      %p39 = scmp.eq.s32.totalorder %s22, 1
      %p40 = por %p38, %p39
      %p41 = scmp.ne.s32.totalorder %s30, %s31
      %p42 = scmp.eq.s32.totalorder %s22, 0
      %p43 = por %p41, %p42
      %p44 = scmp.ne.s32.totalorder %s30, %s31
      %p45 = scmp.eq.s32.totalorder %s23, 1
      %p46 = por %p44, %p45
      %p48 = scmp.ne.s32.totalorder %s31, %s47
      %p49 = scmp.eq.s32.totalorder %s23, 0
      %p50 = por %p48, %p49
      %s52 = sadd.s32 %s51, 1
      %p55 = scmp.eq.s32.totalorder %s17, 1
      %p56 = scmp.ne.s32.totalorder %s51, %s53
      %p57 = scmp.eq.s32.totalorder %s17, 0
      %p58 = por %p56, %p57
      %p59 = scmp.ne.s32.totalorder %s51, %s53
      %p60 = scmp.eq.s32.totalorder %s22, 1
      %p61 = por %p59, %p60
      %p62 = scmp.ne.s32.totalorder %s53, %s54
      %p63 = scmp.eq.s32.totalorder %s22, 0
      %p64 = por %p62, %p63
      %p65 = scmp.ne.s32.totalorder %s53, %s54
      %p66 = scmp.eq.s32.totalorder %s23, 1
      %p67 = por %p65, %p66
      %p69 = scmp.ne.s32.totalorder %s54, %s68
      %p70 = scmp.eq.s32.totalorder %s23, 0
      %p71 = por %p69, %p70
      %s73 = sadd.s32 %s72, 1
      %p76 = scmp.eq.s32.totalorder %s17, 1
      %p77 = scmp.ne.s32.totalorder %s72, %s74
      %p78 = scmp.eq.s32.totalorder %s17, 0
      %p79 = por %p77, %p78
      %p80 = scmp.ne.s32.totalorder %s72, %s74
      %p81 = scmp.eq.s32.totalorder %s22, 1
      %p82 = por %p80, %p81
      %p83 = scmp.ne.s32.totalorder %s74, %s75
      %p84 = scmp.eq.s32.totalorder %s22, 0
      %p85 = por %p83, %p84
      %p86 = scmp.ne.s32.totalorder %s74, %s75
      %p87 = scmp.eq.s32.totalorder %s23, 1
      %p88 = por %p86, %p87
      %p90 = scmp.ne.s32.totalorder %s75, %s89
      %p91 = scmp.eq.s32.totalorder %s23, 0
      %p92 = por %p90, %p91
      %s94 = sadd.s32 %s93, 1
      %p97 = scmp.eq.s32.totalorder %s17, 1
      %p98 = scmp.ne.s32.totalorder %s93, %s95
      %p99 = scmp.eq.s32.totalorder %s17, 0
      %p100 = por %p98, %p99
      %p101 = scmp.ne.s32.totalorder %s93, %s95
      %p102 = scmp.eq.s32.totalorder %s22, 1
      %p103 = por %p101, %p102
      %p104 = scmp.ne.s32.totalorder %s95, %s96
      %p105 = scmp.eq.s32.totalorder %s22, 0
      %p106 = por %p104, %p105
      %p107 = scmp.ne.s32.totalorder %s95, %s96
      %p108 = scmp.eq.s32.totalorder %s23, 1
      %p109 = por %p107, %p108
      %p111 = scmp.ne.s32.totalorder %s96, %s110
      %p112 = scmp.eq.s32.totalorder %s23, 0
      %p113 = por %p111, %p112
      %s114 = ssub.s32 %s17, %s24
      %p115 = scmp.eq.s32.totalorder %s114, 0
      %s117 = sadd.s32 %s116, 1
      %s118 = scalar_select %p115, %s116, %s117
      %p121 = pneg %p115
      %p122 = scmp.eq.s32.totalorder %s17, 1
      %p123 = por %p121, %p122
      %p124 = scmp.ne.s32.totalorder %s116, %s119
      %p125 = scmp.eq.s32.totalorder %s17, 0
      %p126 = por %p124, %p125
      %p127 = scmp.ne.s32.totalorder %s116, %s119
      %p128 = scmp.eq.s32.totalorder %s22, 1
      %p129 = por %p127, %p128
      %p130 = scmp.ne.s32.totalorder %s119, %s120
      %p131 = scmp.eq.s32.totalorder %s22, 0
      %p132 = por %p130, %p131
      %p133 = scmp.ne.s32.totalorder %s119, %s120
      %p134 = scmp.eq.s32.totalorder %s23, 1
      %p135 = por %p133, %p134
      %p137 = scmp.ne.s32.totalorder %s120, %s136
      %p138 = scmp.eq.s32.totalorder %s23, 0
      %p139 = por %p137, %p138
      %p140 = scmp.le.s32.totalorder 1, %s17
      %p141 = scmp.lt.s32.totalorder %s17, 3
      %p142 = pnand %p140, %p141
      %p143 = pneg %p142
      // Predicated region
      $region9: #{tpu_custom_call.1} parent=5 // pred_check
        _
      $region10: #{tpu_custom_call.1} parent=5 // pred_check_branch
        %145 = sbr.rel (%p142) target = $region12
      $region11: #{tpu_custom_call.1} parent=5 // pred_region
        %s146 = ssub.s32 %s17, 1
        // Predicated region
        $region13: #{tpu_custom_call.1} parent=11 // pred_check
          %p147 = pneg %p64
        $region14: #{tpu_custom_call.1} parent=11 // pred_check_branch
          %149 = sbr.rel (%p147) target = $region16
        $region15: #{tpu_custom_call.1} parent=11 // pred_region
          %151 = vsyncadd [#allocation6], 0
          %s152 = sshll.u32 %s1, 4
          %s153 = int_to_ptr.hbm [resolvable:$true] %s152
          %s154 = sshll.u32 [#allocation5], 4
          %s155 = int_to_ptr.vmem [resolvable:$true] %s154
          %160 = dma.hbm_to_vmem [thread:$0]  %s153, 8192, %s155, [#allocation6], 512, 512, 32
        $region16: #{tpu_custom_call.1} parent=11 // pred_fallthru
          _
        // Predicated region
        $region17: #{tpu_custom_call.1} parent=11 // pred_check
          %p161 = pneg %p85
        $region18: #{tpu_custom_call.1} parent=11 // pred_check_branch
          %163 = sbr.rel (%p161) target = $region20
        $region19: #{tpu_custom_call.1} parent=11 // pred_region
          %165 = vsyncadd [#allocation6], 0
          %s166 = sshll.u32 %s2, 4
          %s167 = int_to_ptr.hbm [resolvable:$true] %s166
          %s168 = sshll.u32 [#allocation7], 4
          %s169 = int_to_ptr.vmem [resolvable:$true] %s168
          %174 = dma.hbm_to_vmem [thread:$0]  %s167, 8192, %s169, [#allocation6], 128, 128, 8
        $region20: #{tpu_custom_call.1} parent=11 // pred_fallthru
          _
        // Predicated region
        $region21: #{tpu_custom_call.1} parent=11 // pred_check
          %p175 = pneg %p106
        $region22: #{tpu_custom_call.1} parent=11 // pred_check_branch
          %177 = sbr.rel (%p175) target = $region24
        $region23: #{tpu_custom_call.1} parent=11 // pred_region
          _
        $region24: #{tpu_custom_call.1} parent=11 // pred_fallthru
          _
      $region12: #{tpu_custom_call.1} parent=5 // pred_fallthru
        _
      %p178 = scmp.lt.s32.totalorder %s17, 2
      // Predicated region
      $region25: #{tpu_custom_call.1} parent=5 // pred_check
        %p179 = pneg %p178
      $region26: #{tpu_custom_call.1} parent=5 // pred_check_branch
        %181 = sbr.rel (%p179) target = $region28
      $region27: #{tpu_custom_call.1} parent=5 // pred_region
        // Predicated region
        $region29: #{tpu_custom_call.1} parent=27 // pred_check
          %p182 = pneg %p37
        $region30: #{tpu_custom_call.1} parent=27 // pred_check_branch
          %184 = sbr.rel (%p182) target = $region32
        $region31: #{tpu_custom_call.1} parent=27 // pred_region
          %s185 = sand.u32 %s27, 1
          %s186 = scalar_lea.sflag [#allocation3], %s185
          %s187 = sand.u32 %s27, 1
          %s188 = smul.addr %s187, 16
          %s189 = scalar_lea.vmem [#allocation2], %s188
          %s190 = smul.u32 2, %s17
          %192 = vsyncadd %s186, 0
          %s193 = smul.addr %s190, 8
          %s194 = scalar_lea.hbm %s0, %s193
          %s195 = sshll.u32 %s194, 4
          %s196 = int_to_ptr.hbm [resolvable:$true] %s195
          %s197 = sshll.u32 %s189, 4
          %s198 = int_to_ptr.vmem [resolvable:$true] %s197
          %203 = dma.hbm_to_vmem [thread:$0]  %s196, 256, %s198, %s186, 128, 128, 8
        $region32: #{tpu_custom_call.1} parent=27 // pred_fallthru
          _
      $region28: #{tpu_custom_call.1} parent=5 // pred_fallthru
        _
      %p204 = scmp.le.s32.totalorder 1, %s17
      %p205 = scmp.lt.s32.totalorder %s17, 3
      %p206 = pnand %p204, %p205
      %p207 = pneg %p206
      // Predicated region
      $region33: #{tpu_custom_call.1} parent=5 // pred_check
        _
      $region34: #{tpu_custom_call.1} parent=5 // pred_check_branch
        %209 = sbr.rel (%p206) target = $region36
      $region35: #{tpu_custom_call.1} parent=5 // pred_region
        %s210 = ssub.s32 %s17, 1
        %s211 = sand.u32 %s30, 1
        %s212 = scalar_lea.sflag [#allocation3], %s211
        %s213 = sand.u32 %s30, 1
        %s214 = smul.addr %s213, 16
        %s215 = scalar_lea.vmem [#allocation2], %s214
        // Predicated region
        $region37: #{tpu_custom_call.1} parent=35 // pred_check
          %p216 = pneg %p43
        $region38: #{tpu_custom_call.1} parent=35 // pred_check_branch
          %218 = sbr.rel (%p216) target = $region40
        $region39: #{tpu_custom_call.1} parent=35 // pred_region
          %220 = dma.done %s212, 256
        $region40: #{tpu_custom_call.1} parent=35 // pred_fallthru
          _
        // Predicated region
        $region41: #{tpu_custom_call.1} parent=35 // pred_check
          %p221 = pneg %p64
        $region42: #{tpu_custom_call.1} parent=35 // pred_check_branch
          %223 = sbr.rel (%p221) target = $region44
        $region43: #{tpu_custom_call.1} parent=35 // pred_region
          %225 = dma.done [#allocation6], 8192
        $region44: #{tpu_custom_call.1} parent=35 // pred_fallthru
          _
        // Predicated region
        $region45: #{tpu_custom_call.1} parent=35 // pred_check
          %p226 = pneg %p85
        $region46: #{tpu_custom_call.1} parent=35 // pred_check_branch
          %228 = sbr.rel (%p226) target = $region48
        $region47: #{tpu_custom_call.1} parent=35 // pred_region
          %230 = dma.done [#allocation6], 8192
        $region48: #{tpu_custom_call.1} parent=35 // pred_fallthru
          _
        %s231 = sand.u32 %s30, 1
        %s232 = scalar_lea.sflag [#allocation3], %s231
        %s233 = sand.u32 %s30, 1
        %s234 = smul.addr %s233, 16
        %s235 = scalar_lea.vmem [#allocation2], %s234
        %p236 = pneg %p43
        %p237 = pneg %p40
        %p238 = pneg %p64
        %p239 = pneg %p61
        %p240 = pneg %p85
        %p241 = pneg %p82
        %p242 = pneg %p106
        %p243 = pneg %p103
        %p244 = pneg %p132
        %p245 = pneg %p129
        %s246 = sand.u32 %s119, 1
        %s247 = scalar_lea.sflag [#allocation4], %s246
        %s248 = sand.u32 %s119, 1
        %s249 = smul.addr %s248, 16
        %s250 = scalar_lea.vmem [#allocation8], %s249
        %s251 = smul.u32 2, %s22
        %s252 = smul.u32 2, %s22
        %v253 = vld [vmem:[%s3] sm:$0x3]
        %v254 = vld [vmem:[%s215] sm:$0xff]
        %v255 = vld [vmem:[%s215 + $0x8] sm:$0xff]
        %vm256 = vcmask 261120
        %v257 = vsel %vm256, %v254, 0.0
        %v258 = vsel %vm256, %v255, 0.0
        %vm259 = vcmp.gt.f32.partialorder %v257, 0.0
        %vm260 = vcmp.gt.f32.partialorder %v258, 0.0
        %v261 = vmul.f32 %v257, 0.2
        %v262 = vmul.f32 %v258, 0.2
        %v263 = vsel %vm259, %v257, %v261
        %v264 = vsel %vm260, %v258, %v262
        %v265 = vld [vmem:[#allocation5] sm:$0xff]
        %v266 = vld [vmem:[#allocation5 + $0x8] sm:$0xff]
        %v267 = vld [vmem:[#allocation5 + $0x10] sm:$0xff]
        %v268 = vld [vmem:[#allocation5 + $0x18] sm:$0xff]
        %v269 = vld [vmem:[#allocation5 + $0x20] sm:$0xff]
        %v270 = vld [vmem:[#allocation5 + $0x28] sm:$0xff]
        %v271 = vld [vmem:[#allocation5 + $0x30] sm:$0xff]
        %v272 = vld [vmem:[#allocation5 + $0x38] sm:$0xff]
        %v273 = vld [vmem:[#allocation5 + $0x40] sm:$0xff]
        %v274 = vld [vmem:[#allocation5 + $0x48] sm:$0xff]
        %v275 = vld [vmem:[#allocation5 + $0x50] sm:$0xff]
        %v276 = vld [vmem:[#allocation5 + $0x58] sm:$0xff]
        %v277 = vld [vmem:[#allocation5 + $0x60] sm:$0xff]
        %v278 = vld [vmem:[#allocation5 + $0x68] sm:$0xff]
        %v279 = vld [vmem:[#allocation5 + $0x70] sm:$0xff]
        %v280 = vld [vmem:[#allocation5 + $0x78] sm:$0xff]
        %v281 = vld [vmem:[#allocation5 + $0x80] sm:$0xff]
        %v282 = vld [vmem:[#allocation5 + $0x88] sm:$0xff]
        %v283 = vld [vmem:[#allocation5 + $0x90] sm:$0xff]
        %v284 = vld [vmem:[#allocation5 + $0x98] sm:$0xff]
        %v285 = vld [vmem:[#allocation5 + $0xa0] sm:$0xff]
        %v286 = vld [vmem:[#allocation5 + $0xa8] sm:$0xff]
        %v287 = vld [vmem:[#allocation5 + $0xb0] sm:$0xff]
        %v288 = vld [vmem:[#allocation5 + $0xb8] sm:$0xff]
        %v289 = vld [vmem:[#allocation5 + $0xc0] sm:$0xff]
        %v290 = vld [vmem:[#allocation5 + $0xc8] sm:$0xff]
        %v291 = vld [vmem:[#allocation5 + $0xd0] sm:$0xff]
        %v292 = vld [vmem:[#allocation5 + $0xd8] sm:$0xff]
        %v293 = vld [vmem:[#allocation5 + $0xe0] sm:$0xff]
        %v294 = vld [vmem:[#allocation5 + $0xe8] sm:$0xff]
        %v295 = vld [vmem:[#allocation5 + $0xf0] sm:$0xff]
        %v296 = vld [vmem:[#allocation5 + $0xf8] sm:$0xff]
        %v297 = vld [vmem:[#allocation5 + $0x100] sm:$0xff]
        %v298 = vld [vmem:[#allocation5 + $0x108] sm:$0xff]
        %v299 = vld [vmem:[#allocation5 + $0x110] sm:$0xff]
        %v300 = vld [vmem:[#allocation5 + $0x118] sm:$0xff]
        %v301 = vld [vmem:[#allocation5 + $0x120] sm:$0xff]
        %v302 = vld [vmem:[#allocation5 + $0x128] sm:$0xff]
        %v303 = vld [vmem:[#allocation5 + $0x130] sm:$0xff]
        %v304 = vld [vmem:[#allocation5 + $0x138] sm:$0xff]
        %v305 = vld [vmem:[#allocation5 + $0x140] sm:$0xff]
        %v306 = vld [vmem:[#allocation5 + $0x148] sm:$0xff]
        %v307 = vld [vmem:[#allocation5 + $0x150] sm:$0xff]
        %v308 = vld [vmem:[#allocation5 + $0x158] sm:$0xff]
        %v309 = vld [vmem:[#allocation5 + $0x160] sm:$0xff]
        %v310 = vld [vmem:[#allocation5 + $0x168] sm:$0xff]
        %v311 = vld [vmem:[#allocation5 + $0x170] sm:$0xff]
        %v312 = vld [vmem:[#allocation5 + $0x178] sm:$0xff]
        %v313 = vld [vmem:[#allocation5 + $0x180] sm:$0xff]
        %v314 = vld [vmem:[#allocation5 + $0x188] sm:$0xff]
        %v315 = vld [vmem:[#allocation5 + $0x190] sm:$0xff]
        %v316 = vld [vmem:[#allocation5 + $0x198] sm:$0xff]
        %v317 = vld [vmem:[#allocation5 + $0x1a0] sm:$0xff]
        %v318 = vld [vmem:[#allocation5 + $0x1a8] sm:$0xff]
        %v319 = vld [vmem:[#allocation5 + $0x1b0] sm:$0xff]
        %v320 = vld [vmem:[#allocation5 + $0x1b8] sm:$0xff]
        %v321 = vld [vmem:[#allocation5 + $0x1c0] sm:$0xff]
        %v322 = vld [vmem:[#allocation5 + $0x1c8] sm:$0xff]
        %v323 = vld [vmem:[#allocation5 + $0x1d0] sm:$0xff]
        %v324 = vld [vmem:[#allocation5 + $0x1d8] sm:$0xff]
        %v325 = vld [vmem:[#allocation5 + $0x1e0] sm:$0xff]
        %v326 = vld [vmem:[#allocation5 + $0x1e8] sm:$0xff]
        %v327 = vld [vmem:[#allocation5 + $0x1f0] sm:$0xff]
        %v328 = vld [vmem:[#allocation5 + $0x1f8] sm:$0xff]
        %329 = vmatpush.msra.mxu0 %v325
        %330 = vmatpush.msra.mxu0 %v321
        %331 = vmatpush.msra.mxu0 %v317
        %332 = vmatpush.msra.mxu0 %v313
        %333 = vmatpush.msra.mxu0 %v309
        %334 = vmatpush.msra.mxu0 %v305
        %335 = vmatpush.msra.mxu0 %v301
        %336 = vmatpush.msra.mxu0 %v297
        %337 = vmatpush.msra.mxu0 %v293
        %338 = vmatpush.msra.mxu0 %v289
        %339 = vmatpush.msra.mxu0 %v285
        %340 = vmatpush.msra.mxu0 %v281
        %341 = vmatpush.msra.mxu0 %v277
        %342 = vmatpush.msra.mxu0 %v273
        %343 = vmatpush.msra.mxu0 %v269
        %344 = vmatpush.msra.mxu0 %v265
        %345 = vmatmul.f32.gmra.mxu0 %v263
        %v346 = vpop.f32.mrf.mxu0
        %v347 = vadd.f32 0.0, %v346
        %348 = vmatmul.f32.gmra.mxu0 %v264
        %v349 = vpop.f32.mrf.mxu0
        %v350 = vadd.f32 0.0, %v349
        %351 = vdwg.mxu0
        %352 = vmatpush.msra.mxu0 %v326
        %353 = vmatpush.msra.mxu0 %v322
        %354 = vmatpush.msra.mxu0 %v318
        %355 = vmatpush.msra.mxu0 %v314
        %356 = vmatpush.msra.mxu0 %v310
        %357 = vmatpush.msra.mxu0 %v306
        %358 = vmatpush.msra.mxu0 %v302
        %359 = vmatpush.msra.mxu0 %v298
        %360 = vmatpush.msra.mxu0 %v294
        %361 = vmatpush.msra.mxu0 %v290
        %362 = vmatpush.msra.mxu0 %v286
        %363 = vmatpush.msra.mxu0 %v282
        %364 = vmatpush.msra.mxu0 %v278
        %365 = vmatpush.msra.mxu0 %v274
        %366 = vmatpush.msra.mxu0 %v270
        %367 = vmatpush.msra.mxu0 %v266
        %368 = vmatmul.f32.gmra.mxu0 %v263
        %v369 = vpop.f32.mrf.mxu0
        %v370 = vadd.f32 0.0, %v369
        %371 = vmatmul.f32.gmra.mxu0 %v264
        %v372 = vpop.f32.mrf.mxu0
        %v373 = vadd.f32 0.0, %v372
        %374 = vdwg.mxu0
        %375 = vmatpush.msra.mxu0 %v327
        %376 = vmatpush.msra.mxu0 %v323
        %377 = vmatpush.msra.mxu0 %v319
        %378 = vmatpush.msra.mxu0 %v315
        %379 = vmatpush.msra.mxu0 %v311
        %380 = vmatpush.msra.mxu0 %v307
        %381 = vmatpush.msra.mxu0 %v303
        %382 = vmatpush.msra.mxu0 %v299
        %383 = vmatpush.msra.mxu0 %v295
        %384 = vmatpush.msra.mxu0 %v291
        %385 = vmatpush.msra.mxu0 %v287
        %386 = vmatpush.msra.mxu0 %v283
        %387 = vmatpush.msra.mxu0 %v279
        %388 = vmatpush.msra.mxu0 %v275
        %389 = vmatpush.msra.mxu0 %v271
        %390 = vmatpush.msra.mxu0 %v267
        %391 = vmatmul.f32.gmra.mxu0 %v263
        %v392 = vpop.f32.mrf.mxu0
        %v393 = vadd.f32 0.0, %v392
        %394 = vmatmul.f32.gmra.mxu0 %v264
        %v395 = vpop.f32.mrf.mxu0
        %v396 = vadd.f32 0.0, %v395
        %397 = vdwg.mxu0
        %398 = vmatpush.msra.mxu0 %v328
        %399 = vmatpush.msra.mxu0 %v324
        %400 = vmatpush.msra.mxu0 %v320
        %401 = vmatpush.msra.mxu0 %v316
        %402 = vmatpush.msra.mxu0 %v312
        %403 = vmatpush.msra.mxu0 %v308
        %404 = vmatpush.msra.mxu0 %v304
        %405 = vmatpush.msra.mxu0 %v300
        %406 = vmatpush.msra.mxu0 %v296
        %407 = vmatpush.msra.mxu0 %v292
        %408 = vmatpush.msra.mxu0 %v288
        %409 = vmatpush.msra.mxu0 %v284
        %410 = vmatpush.msra.mxu0 %v280
        %411 = vmatpush.msra.mxu0 %v276
        %412 = vmatpush.msra.mxu0 %v272
        %413 = vmatpush.msra.mxu0 %v268
        %414 = vmatmul.f32.gmra.mxu0 %v263
        %v415 = vpop.f32.mrf.mxu0
        %v416 = vadd.f32 0.0, %v415
        %417 = vmatmul.f32.gmra.mxu0 %v264
        %v418 = vpop.f32.mrf.mxu0
        %v419 = vadd.f32 0.0, %v418
        %420 = vdwg.mxu0
        %v421 = vlaneseq
        %v422 = vshrl.u32 %v421, 7
        %v423 = vadd.s32 %v422, 8
        %vm424 = vcmp.lt.s32.totalorder %v422, 0
        %v425 = vsub.s32 0, %v422
        %v426 = vsel %vm424, %v425, %v422
        %v427 = vshrl.u32 %v426, 3
        %v428 = vand.u32 %v426, 7
        %v429 = vsub.s32 0, %v428
        %v430 = vsel %vm424, %v429, %v428
        %vm431 = vcmp.lt.s32.totalorder %v423, 0
        %v432 = vsub.s32 0, %v423
        %v433 = vsel %vm431, %v432, %v423
        %v434 = vshrl.u32 %v433, 3
        %v435 = vand.u32 %v433, 7
        %v436 = vsub.s32 0, %v435
        %v437 = vsel %vm431, %v436, %v435
        %vm438 = vcmp.ne.s32.totalorder %v430, 0
        %vm439 = vcmp.ne.s32.totalorder %v437, 0
        %vm440 = vcmp.lt.s32.totalorder %v430, 0
        %vm441 = vcmp.lt.s32.totalorder %v437, 0
        %vm442 = vmand %vm440, %vm438
        %vm443 = vmand %vm441, %vm439
        %v444 = vadd.s32 %v430, 8
        %v445 = vadd.s32 %v437, 8
        %v446 = vsel %vm442, %v444, %v430
        %v447 = vsel %vm443, %v445, %v437
        %vm448 = vcmp.eq.s32.totalorder %v446, 0
        %vm449 = vcmp.eq.s32.totalorder %v447, 0
        %vm450 = vcmp.eq.s32.totalorder %v446, 7
        %vm451 = vcmp.eq.s32.totalorder %v447, 7
        %v452 = vrot.slane %v416, 7
        %v453 = vrot.slane %v419, 7
        %vm454 = vcmp.lt.s32.totalorder %v422, 1
        %v455 = vsel %vm454, %v452, %v453
        %v456 = vsel %vm454, %v453, %v452
        %v457 = vsel %vm448, 1, 0
        %v458 = vsel %vm449, 1, 0
        %vm459 = vcmp.eq.s32.totalorder %v457, 1
        %vm460 = vcmp.eq.s32.totalorder %v458, 1
        %v461 = vsel %vm459, 0.0, %v456
        %v462 = vsel %vm460, 0.0, %v455
        %v463 = vrot.slane %v347, 1
        %v464 = vrot.slane %v350, 1
        %vm465 = vcmp.lt.s32.totalorder %v422, 7
        %v466 = vsel %vm465, %v463, %v464
        %v467 = vsel %vm465, %v464, %v463
        %v468 = vsel %vm450, 1, 0
        %v469 = vsel %vm451, 1, 0
        %vm470 = vcmp.eq.s32.totalorder %v468, 1
        %vm471 = vcmp.eq.s32.totalorder %v469, 1
        %v472 = vsel %vm470, 0.0, %v466
        %v473 = vsel %vm471, 0.0, %v467
        %v474 = vadd.f32 %v370, %v461
        %v475 = vadd.f32 %v393, %v472
        %v476 = vadd.f32 %v373, %v462
        %v477 = vadd.f32 %v396, %v473
        %v478 = vperm.slane %v253, 0
        %v479 = vadd.f32 %v257, %v478
        %v480 = vadd.f32 %v258, %v478
        %v481 = vadd.f32 %v479, %v474
        %v482 = vadd.f32 %v479, %v475
        %v483 = vadd.f32 %v480, %v476
        %v484 = vadd.f32 %v480, %v477
        %vm485 = vcmp.gt.f32.partialorder %v481, 0.0
        %vm486 = vcmp.gt.f32.partialorder %v482, 0.0
        %vm487 = vcmp.gt.f32.partialorder %v483, 0.0
        %vm488 = vcmp.gt.f32.partialorder %v484, 0.0
        %v489 = vmul.f32 %v481, 0.2
        %v490 = vmul.f32 %v482, 0.2
        %v491 = vmul.f32 %v483, 0.2
        %v492 = vmul.f32 %v484, 0.2
        %v493 = vsel %vm485, %v481, %v489
        %v494 = vsel %vm486, %v482, %v490
        %v495 = vsel %vm487, %v483, %v491
        %v496 = vsel %vm488, %v484, %v492
        %v497 = vrot.slane %v494, 7
        %v498 = vrot.slane %v496, 7
        %v499 = vsel %vm454, %v497, %v498
        %v500 = vsel %vm454, %v498, %v497
        %v501 = vsel %vm459, 0.0, %v500
        %v502 = vsel %vm460, 0.0, %v499
        %v503 = vrot.slane %v493, 1
        %v504 = vrot.slane %v495, 1
        %v505 = vsel %vm465, %v503, %v504
        %v506 = vsel %vm465, %v504, %v503
        %v507 = vsel %vm470, 0.0, %v505
        %v508 = vsel %vm471, 0.0, %v506
        %v509 = vld [vmem:[#allocation7 + $0x80] sm:$0xff]
        %v510 = vld [vmem:[#allocation7 + $0x88] sm:$0xff]
        %v511 = vld [vmem:[#allocation7 + $0x90] sm:$0xff]
        %v512 = vld [vmem:[#allocation7 + $0x98] sm:$0xff]
        %v513 = vld [vmem:[#allocation7 + $0xa0] sm:$0xff]
        %v514 = vld [vmem:[#allocation7 + $0xa8] sm:$0xff]
        %v515 = vld [vmem:[#allocation7 + $0xb0] sm:$0xff]
        %v516 = vld [vmem:[#allocation7 + $0xb8] sm:$0xff]
        %v517 = vld [vmem:[#allocation7 + $0xc0] sm:$0xff]
        %v518 = vld [vmem:[#allocation7 + $0xc8] sm:$0xff]
        %v519 = vld [vmem:[#allocation7 + $0xd0] sm:$0xff]
        %v520 = vld [vmem:[#allocation7 + $0xd8] sm:$0xff]
        %v521 = vld [vmem:[#allocation7 + $0xe0] sm:$0xff]
        %v522 = vld [vmem:[#allocation7 + $0xe8] sm:$0xff]
        %v523 = vld [vmem:[#allocation7 + $0xf0] sm:$0xff]
        %v524 = vld [vmem:[#allocation7 + $0xf8] sm:$0xff]
        %v525 = vld [vmem:[#allocation7 + $0x100] sm:$0xff]
        %v526 = vld [vmem:[#allocation7 + $0x108] sm:$0xff]
        %v527 = vld [vmem:[#allocation7 + $0x110] sm:$0xff]
        %v528 = vld [vmem:[#allocation7 + $0x118] sm:$0xff]
        %v529 = vld [vmem:[#allocation7 + $0x120] sm:$0xff]
        %v530 = vld [vmem:[#allocation7 + $0x128] sm:$0xff]
        %v531 = vld [vmem:[#allocation7 + $0x130] sm:$0xff]
        %v532 = vld [vmem:[#allocation7 + $0x138] sm:$0xff]
        %v533 = vld [vmem:[#allocation7 + $0x140] sm:$0xff]
        %v534 = vld [vmem:[#allocation7 + $0x148] sm:$0xff]
        %v535 = vld [vmem:[#allocation7 + $0x150] sm:$0xff]
        %v536 = vld [vmem:[#allocation7 + $0x158] sm:$0xff]
        %v537 = vld [vmem:[#allocation7 + $0x160] sm:$0xff]
        %v538 = vld [vmem:[#allocation7 + $0x168] sm:$0xff]
        %v539 = vld [vmem:[#allocation7 + $0x170] sm:$0xff]
        %v540 = vld [vmem:[#allocation7 + $0x178] sm:$0xff]
        %v541 = vld [vmem:[#allocation7] sm:$0xff]
        %v542 = vld [vmem:[#allocation7 + $0x8] sm:$0xff]
        %v543 = vld [vmem:[#allocation7 + $0x10] sm:$0xff]
        %v544 = vld [vmem:[#allocation7 + $0x18] sm:$0xff]
        %v545 = vld [vmem:[#allocation7 + $0x20] sm:$0xff]
        %v546 = vld [vmem:[#allocation7 + $0x28] sm:$0xff]
        %v547 = vld [vmem:[#allocation7 + $0x30] sm:$0xff]
        %v548 = vld [vmem:[#allocation7 + $0x38] sm:$0xff]
        %v549 = vld [vmem:[#allocation7 + $0x40] sm:$0xff]
        %v550 = vld [vmem:[#allocation7 + $0x48] sm:$0xff]
        %v551 = vld [vmem:[#allocation7 + $0x50] sm:$0xff]
        %v552 = vld [vmem:[#allocation7 + $0x58] sm:$0xff]
        %v553 = vld [vmem:[#allocation7 + $0x60] sm:$0xff]
        %v554 = vld [vmem:[#allocation7 + $0x68] sm:$0xff]
        %v555 = vld [vmem:[#allocation7 + $0x70] sm:$0xff]
        %v556 = vld [vmem:[#allocation7 + $0x78] sm:$0xff]
        %557 = vmatpush.msra.mxu0 %v556
        %558 = vmatpush.msra.mxu0 %v555
        %559 = vmatpush.msra.mxu0 %v554
        %560 = vmatpush.msra.mxu0 %v553
        %561 = vmatpush.msra.mxu0 %v552
        %562 = vmatpush.msra.mxu0 %v551
        %563 = vmatpush.msra.mxu0 %v550
        %564 = vmatpush.msra.mxu0 %v549
        %565 = vmatpush.msra.mxu0 %v548
        %566 = vmatpush.msra.mxu0 %v547
        %567 = vmatpush.msra.mxu0 %v546
        %568 = vmatpush.msra.mxu0 %v545
        %569 = vmatpush.msra.mxu0 %v544
        %570 = vmatpush.msra.mxu0 %v543
        %571 = vmatpush.msra.mxu0 %v542
        %572 = vmatpush.msra.mxu0 %v541
        %573 = vmatmul.f32.gmra.mxu0 %v501
        %v574 = vpop.f32.mrf.mxu0
        %v575 = vadd.f32 0.0, %v574
        %576 = vmatmul.f32.gmra.mxu0 %v502
        %v577 = vpop.f32.mrf.mxu0
        %v578 = vadd.f32 0.0, %v577
        %579 = vdwg.mxu0
        %580 = vmatpush.msra.mxu0 %v524
        %581 = vmatpush.msra.mxu0 %v523
        %582 = vmatpush.msra.mxu0 %v522
        %583 = vmatpush.msra.mxu0 %v521
        %584 = vmatpush.msra.mxu0 %v520
        %585 = vmatpush.msra.mxu0 %v519
        %586 = vmatpush.msra.mxu0 %v518
        %587 = vmatpush.msra.mxu0 %v517
        %588 = vmatpush.msra.mxu0 %v516
        %589 = vmatpush.msra.mxu0 %v515
        %590 = vmatpush.msra.mxu0 %v514
        %591 = vmatpush.msra.mxu0 %v513
        %592 = vmatpush.msra.mxu0 %v512
        %593 = vmatpush.msra.mxu0 %v511
        %594 = vmatpush.msra.mxu0 %v510
        %595 = vmatpush.msra.mxu0 %v509
        %596 = vmatmul.f32.gmra.mxu0 %v493
        %v597 = vpop.f32.mrf.mxu0
        %v598 = vadd.f32 %v575, %v597
        %599 = vmatmul.f32.gmra.mxu0 %v495
        %v600 = vpop.f32.mrf.mxu0
        %v601 = vadd.f32 %v578, %v600
        %602 = vdwg.mxu0
        %603 = vmatpush.msra.mxu0 %v540
        %604 = vmatpush.msra.mxu0 %v539
        %605 = vmatpush.msra.mxu0 %v538
        %606 = vmatpush.msra.mxu0 %v537
        %607 = vmatpush.msra.mxu0 %v536
        %608 = vmatpush.msra.mxu0 %v535
        %609 = vmatpush.msra.mxu0 %v534
        %610 = vmatpush.msra.mxu0 %v533
        %611 = vmatpush.msra.mxu0 %v532
        %612 = vmatpush.msra.mxu0 %v531
        %613 = vmatpush.msra.mxu0 %v530
        %614 = vmatpush.msra.mxu0 %v529
        %615 = vmatpush.msra.mxu0 %v528
        %616 = vmatpush.msra.mxu0 %v527
        %617 = vmatpush.msra.mxu0 %v526
        %618 = vmatpush.msra.mxu0 %v525
        %619 = vmatmul.f32.gmra.mxu0 %v494
        %v620 = vpop.f32.mrf.mxu0
        %v621 = vadd.f32 %v598, %v620
        %622 = vmatmul.f32.gmra.mxu0 %v496
        %v623 = vpop.f32.mrf.mxu0
        %v624 = vadd.f32 %v601, %v623
        %625 = vdwg.mxu0
        %v626 = vld [vmem:[#allocation7 + $0x180] sm:$0xff]
        %v627 = vld [vmem:[#allocation7 + $0x188] sm:$0xff]
        %v628 = vld [vmem:[#allocation7 + $0x190] sm:$0xff]
        %v629 = vld [vmem:[#allocation7 + $0x198] sm:$0xff]
        %v630 = vld [vmem:[#allocation7 + $0x1a0] sm:$0xff]
        %v631 = vld [vmem:[#allocation7 + $0x1a8] sm:$0xff]
        %v632 = vld [vmem:[#allocation7 + $0x1b0] sm:$0xff]
        %v633 = vld [vmem:[#allocation7 + $0x1b8] sm:$0xff]
        %v634 = vld [vmem:[#allocation7 + $0x1c0] sm:$0xff]
        %v635 = vld [vmem:[#allocation7 + $0x1c8] sm:$0xff]
        %v636 = vld [vmem:[#allocation7 + $0x1d0] sm:$0xff]
        %v637 = vld [vmem:[#allocation7 + $0x1d8] sm:$0xff]
        %v638 = vld [vmem:[#allocation7 + $0x1e0] sm:$0xff]
        %v639 = vld [vmem:[#allocation7 + $0x1e8] sm:$0xff]
        %v640 = vld [vmem:[#allocation7 + $0x1f0] sm:$0xff]
        %v641 = vld [vmem:[#allocation7 + $0x1f8] sm:$0xff]
        %642 = vmatpush.msra.mxu0 %v641
        %643 = vmatpush.msra.mxu0 %v640
        %644 = vmatpush.msra.mxu0 %v639
        %645 = vmatpush.msra.mxu0 %v638
        %646 = vmatpush.msra.mxu0 %v637
        %647 = vmatpush.msra.mxu0 %v636
        %648 = vmatpush.msra.mxu0 %v635
        %649 = vmatpush.msra.mxu0 %v634
        %650 = vmatpush.msra.mxu0 %v633
        %651 = vmatpush.msra.mxu0 %v632
        %652 = vmatpush.msra.mxu0 %v631
        %653 = vmatpush.msra.mxu0 %v630
        %654 = vmatpush.msra.mxu0 %v629
        %655 = vmatpush.msra.mxu0 %v628
        %656 = vmatpush.msra.mxu0 %v627
        %657 = vmatpush.msra.mxu0 %v626
        %658 = vmatmul.f32.gmra.mxu0 %v507
        %v659 = vpop.f32.mrf.mxu0
        %v660 = vadd.f32 0.0, %v659
        %661 = vmatmul.f32.gmra.mxu0 %v508
        %v662 = vpop.f32.mrf.mxu0
        %v663 = vadd.f32 0.0, %v662
        %664 = vdwg.mxu0
        %v665 = vadd.f32 %v621, %v660
        %v666 = vadd.f32 %v624, %v663
        %v667 = vperm.slane %v253, 1
        %v668 = vadd.f32 %v665, %v667
        %v669 = vadd.f32 %v666, %v667
        %v670 = vadd.f32 %v474, %v475
        %v671 = vadd.f32 %v476, %v477
        %v672 = vmul.f32 %v257, 2.0
        %v673 = vmul.f32 %v258, 2.0
        %v674 = vadd.f32 %v672, %v478
        %v675 = vadd.f32 %v673, %v478
        %v676 = vmul.f32 %v670, 0.5
        %v677 = vmul.f32 %v671, 0.5
        %v678 = vadd.f32 %v674, %v676
        %v679 = vadd.f32 %v675, %v677
        %v680 = vadd.f32 %v668, %v678
        %v681 = vadd.f32 %v669, %v679
        %682 = vst.msk [vmem:[%s250] sm:$0xff] %vm256, %v680
        %683 = vst.msk [vmem:[%s250 + $0x8] sm:$0xff] %vm256, %v681
        %s684 = sand.u32 %s119, 1
        %s685 = scalar_lea.sflag [#allocation4], %s684
        %s686 = sand.u32 %s119, 1
        %s687 = smul.addr %s686, 16
        %s688 = scalar_lea.vmem [#allocation8], %s687
        // Predicated region
        $region49: #{tpu_custom_call.1} parent=35 // pred_check
          %p689 = pneg %p129
        $region50: #{tpu_custom_call.1} parent=35 // pred_check_branch
          %691 = sbr.rel (%p689) target = $region52
        $region51: #{tpu_custom_call.1} parent=35 // pred_region
          %s692 = smul.u32 2, %s22
          %694 = vsyncadd %s685, 0
          %s695 = smul.addr %s692, 8
          %s696 = scalar_lea.hbm %s4, %s695
          %s697 = sshll.u32 %s688, 4
          %s698 = int_to_ptr.vmem [resolvable:$true] %s697
          %s699 = sshll.u32 %s696, 4
          %s700 = int_to_ptr.hbm [resolvable:$true] %s699
          %705 = dma.vmem_to_hbm [thread:$0]  %s698, 256, %s700, %s685, 128, 128, 8
        $region52: #{tpu_custom_call.1} parent=35 // pred_fallthru
          _
      $region36: #{tpu_custom_call.1} parent=5 // pred_fallthru
        _
      %p706 = scmp.le.s32.totalorder 2, %s17
      // Predicated region
      $region53: #{tpu_custom_call.1} parent=5 // pred_check
        %p707 = pneg %p706
      $region54: #{tpu_custom_call.1} parent=5 // pred_check_branch
        %709 = sbr.rel (%p707) target = $region56
      $region55: #{tpu_custom_call.1} parent=5 // pred_region
        %s710 = ssub.s32 %s17, 2
        // Predicated region
        $region57: #{tpu_custom_call.1} parent=55 // pred_check
          %p711 = pneg %p135
        $region58: #{tpu_custom_call.1} parent=55 // pred_check_branch
          %713 = sbr.rel (%p711) target = $region60
        $region59: #{tpu_custom_call.1} parent=55 // pred_region
          %s714 = sand.u32 %s120, 1
          %s715 = scalar_lea.sflag [#allocation4], %s714
          %s716 = sand.u32 %s120, 1
          %s717 = smul.addr %s716, 16
          %s718 = scalar_lea.vmem [#allocation8], %s717
          %720 = dma.done %s715, 256
        $region60: #{tpu_custom_call.1} parent=55 // pred_fallthru
          _
      $region56: #{tpu_custom_call.1} parent=5 // pred_fallthru
        _
    $region6: #{tpu_custom_call.1} parent=1 // loop_footer
      %s21 = sadd.s32 1, %s17
    $region7: #{tpu_custom_call.1} parent=1 // loop_footer_branch
      %16 = sbr.rel target = $region3
    $region8: #{tpu_custom_call.1} parent=1 // loop_exit
      _
    %721 = vsyncpa [#allocation3], 1
    %s722 = scalar_lea.sflag [#allocation3], 1
    %723 = vsyncpa %s722, 1
    %724 = vsyncpa [#allocation6], 1
    %725 = vsyncpa [#allocation4], 1
    %s726 = scalar_lea.sflag [#allocation4], 1
    %727 = vsyncpa %s726, 1

</llo_original>
